<compile_context>
chip_gen: v6e
topology: v6e:2x2x1
jax: 0.10.0
libtpu: 0.0.40
codegen_flags: <defaults>
</compile_context>

<pallas_src>
import jax
import jax.numpy as jnp
from jax import lax
from jax.experimental import pallas as pl
from jax.experimental.pallas import tpu as pltpu


def _tcn_kernel(x_ref, w_ref, shift_ref, o_ref):
    # x_ref    : (1, K*C_in, TL)  im2col tile of one batch element
    # w_ref    : (C_out, K*C_in)  conv weight with BN scale folded in
    # shift_ref: (C_out, 1)       (conv_bias - running_mean) * scale + beta
    # o_ref    : (1, C_out, TL)   lane-dense output tile, already NCL layout
    y = jnp.dot(w_ref[...], x_ref[0], preferred_element_type=jnp.float32)
    y = jnp.maximum(y + shift_ref[...], 0.0)   # fused BN shift + ReLU
    o_ref[0] = y.astype(o_ref.dtype)           # Dropout = identity (eval)


def tcn_block_forward(x, weight, bias, gamma, beta, running_mean, running_var,
                      *, kernel_size, stride, dilation, eps=1e-5):
    """x: (N, C_in, L) float32 -> (N, C_out, L_out) float32 (eval-mode)."""
    N, C_in, L = x.shape
    C_out = weight.shape[0]
    K = kernel_size
    L_out = (L - dilation * (K - 1) - 1) // stride + 1
    assert L_out > 0
    KC = K * C_in

    # --- wrapper glue: im2col with taps concatenated on the channel axis ----
    span = (L_out - 1) * stride + 1
    taps = [x[:, :, k * dilation: k * dilation + span: stride] for k in range(K)]
    x_col = jnp.concatenate(taps, axis=1)                     # (N, K*C_in, L_out)

    # Pad L_out to a lane-dense multiple of 128; TL is the lane tile size.
    tl = min(512, -(-L_out // 128) * 128)                     # 128..512, mult of 128
    Lp = -(-L_out // tl) * tl
    if Lp != L_out:
        x_col = jnp.pad(x_col, ((0, 0), (0, 0), (0, Lp - L_out)))

    # Fold conv bias + BatchNorm (running stats) into the weight and a shift.
    scale = gamma * lax.rsqrt(running_var + eps)              # (C_out,)
    # w2[o, k*C_in + c] = weight[o, c, k]  (matches im2col row ordering)
    w2 = jnp.transpose(weight, (0, 2, 1)).reshape(C_out, KC)
    w_fused = (w2 * scale[:, None]).astype(jnp.float32)       # (C_out, K*C_in)
    shift = ((bias - running_mean) * scale + beta).reshape(C_out, 1)
    shift = shift.astype(jnp.float32)

    grid = (N, Lp // tl)
    cost = pl.CostEstimate(
        flops=2 * N * Lp * KC * C_out,
        transcendentals=0,
        bytes_accessed=(x_col.size + w_fused.size + shift.size
                        + N * C_out * Lp) * 4,
    )

    out = pl.pallas_call(
        _tcn_kernel,
        out_shape=jax.ShapeDtypeStruct((N, C_out, Lp), x.dtype),
        grid_spec=pltpu.PrefetchScalarGridSpec(
            num_scalar_prefetch=0,
            grid=grid,
            in_specs=[
                pl.BlockSpec((1, KC, tl), lambda n, j: (n, 0, j)),
                pl.BlockSpec((C_out, KC), lambda n, j: (0, 0)),   # resident
                pl.BlockSpec((C_out, 1), lambda n, j: (0, 0)),    # resident
            ],
            out_specs=pl.BlockSpec((1, C_out, tl), lambda n, j: (n, 0, j)),
        ),
        compiler_params=pltpu.CompilerParams(
            dimension_semantics=("parallel", "parallel"),
        ),
        cost_estimate=cost,
    )(x_col, w_fused, shift)

    return out[:, :, :L_out]   # already (N, C_out, L_out); drop lane padding


def _reference(x, weight, bias, gamma, beta, running_mean, running_var,
               *, stride, dilation, eps=1e-5):
    """Plain-JAX reference matching PyTorch eval-mode tcn_block.forward."""
    y = lax.conv_general_dilated(
        x, weight,
        window_strides=(stride,),
        padding="VALID",
        rhs_dilation=(dilation,),
        dimension_numbers=("NCH", "OIH", "NCH"),
    ) + bias[None, :, None]
    y = (y - running_mean[None, :, None]) / jnp.sqrt(
        running_var[None, :, None] + eps
    ) * gamma[None, :, None] + beta[None, :, None]
    return jnp.maximum(y, 0.0)


if __name__ == "__main__":
    # Small shapes consistent with the module: Conv1d over a temporal sequence.
    N, C_in, C_out, L = 2, 16, 32, 64
    kernel_size, stride, dilation, p = 3, 2, 2, 0.5  # p unused in eval mode

    key = jax.random.PRNGKey(0)
    kx, kw, kb, kg, kbe, km, kv = jax.random.split(key, 7)

    x = jax.random.normal(kx, (N, C_in, L), dtype=jnp.float32)
    weight = 0.1 * jax.random.normal(kw, (C_out, C_in, kernel_size), jnp.float32)
    bias = 0.1 * jax.random.normal(kb, (C_out,), jnp.float32)
    gamma = 1.0 + 0.1 * jax.random.normal(kg, (C_out,), jnp.float32)
    beta = 0.1 * jax.random.normal(kbe, (C_out,), jnp.float32)
    running_mean = 0.1 * jax.random.normal(km, (C_out,), jnp.float32)
    running_var = jax.random.uniform(kv, (C_out,), jnp.float32, 0.5, 1.5)

    out = tcn_block_forward(
        x, weight, bias, gamma, beta, running_mean, running_var,
        kernel_size=kernel_size, stride=stride, dilation=dilation,
    )
    out = jax.block_until_ready(out)

    ref = _reference(
        x, weight, bias, gamma, beta, running_mean, running_var,
        stride=stride, dilation=dilation,
    )
    assert out.shape == ref.shape, (out.shape, ref.shape)
    assert jnp.allclose(out, ref, atol=1e-4, rtol=1e-4), (
        float(jnp.max(jnp.abs(out - ref)))
    )

    print("KERNEL_OK")
</pallas_src>

<mosaic_0001>
module attributes {stable_mosaic.version = 11 : i64} {
  func.func @_tcn_kernel(%arg0: i32, %arg1: i32, %arg2: memref<1x48x128xf32, #tpu.memory_space<vmem>>, %arg3: memref<32x48xf32, #tpu.memory_space<vmem>>, %arg4: memref<32x1xf32, #tpu.memory_space<vmem>>, %arg5: memref<1x32x128xf32, #tpu.memory_space<vmem>>) attributes {dimension_semantics = [#tpu.dimension_semantics<parallel>, #tpu.dimension_semantics<parallel>], iteration_bounds = array<i64: 2, 1>, scalar_prefetch = 0 : i64, scratch_operands = 0 : i64, tpu.core_type = #tpu.core_type<tc>, window_params = [{transform_indices = @transform_0, window_bounds = array<i64: 1, 48, 128>}, {pipeline_mode = #tpu.pipeline_mode<synchronous>, transform_indices = @transform_1, window_bounds = array<i64: 32, 48>}, {pipeline_mode = #tpu.pipeline_mode<synchronous>, transform_indices = @transform_2, window_bounds = array<i64: 32, 1>}, {transform_indices = @transform_3, window_bounds = array<i64: 1, 32, 128>}]} {
    %c0 = arith.constant 0 : index
    %c0_0 = arith.constant 0 : index
    %0 = vector.load %arg3[%c0, %c0_0] : memref<32x48xf32, #tpu.memory_space<vmem>>, vector<32x48xf32>
    %c0_1 = arith.constant 0 : index
    %c0_2 = arith.constant 0 : index
    %c0_3 = arith.constant 0 : index
    %1 = vector.load %arg2[%c0_1, %c0_2, %c0_3] : memref<1x48x128xf32, #tpu.memory_space<vmem>>, vector<1x48x128xf32>
    %2 = vector.shape_cast %1 : vector<1x48x128xf32> to vector<48x128xf32>
    %cst = arith.constant dense<0.000000e+00> : vector<32x128xf32>
    %3 = tpu.matmul %0, %2, %cst {dimension_numbers = #tpu.dot_dimension_numbers<[1], [0], [0], [1], [0, 0, 1, 1], [], []>} : vector<32x48xf32>, vector<48x128xf32>, vector<32x128xf32> -> vector<32x128xf32>
    %c0_4 = arith.constant 0 : index
    %c0_5 = arith.constant 0 : index
    %4 = vector.load %arg4[%c0_4, %c0_5] : memref<32x1xf32, #tpu.memory_space<vmem>>, vector<32x1xf32>
    %5 = vector.broadcast %4 : vector<32x1xf32> to vector<32x128xf32>
    %6 = arith.addf %3, %5 : vector<32x128xf32>
    %cst_6 = arith.constant 0.000000e+00 : f32
    %7 = vector.broadcast %cst_6 : f32 to vector<32x128xf32>
    %8 = arith.maximumf %6, %7 : vector<32x128xf32>
    %c0_7 = arith.constant 0 : index
    %c0_8 = arith.constant 0 : index
    %c0_9 = arith.constant 0 : index
    %9 = vector.load %arg5[%c0_7, %c0_8, %c0_9] : memref<1x32x128xf32, #tpu.memory_space<vmem>>, vector<1x32x128xf32>
    %10 = vector.shape_cast %9 : vector<1x32x128xf32> to vector<32x128xf32>
    %11 = vector.shape_cast %8 : vector<32x128xf32> to vector<1x32x128xf32>
    tpu.vector_store %arg5[%c0_7, %c0_8, %c0_9], %11 {strides = array<i32>} : memref<1x32x128xf32, #tpu.memory_space<vmem>>, vector<1x32x128xf32>,
    return
  }
  func.func @transform_0(%arg0: i32, %arg1: i32) -> (i32, i32, i32) {
    %c0_i32 = arith.constant 0 : i32
    %c0_i32_0 = arith.constant 0 : i32
    return %arg0, %c0_i32, %arg1 : i32, i32, i32
  }
  func.func @transform_1(%arg0: i32, %arg1: i32) -> (i32, i32) {
    %c0_i32 = arith.constant 0 : i32
    %c0_i32_0 = arith.constant 0 : i32
    %c0_i32_1 = arith.constant 0 : i32
    return %c0_i32, %c0_i32_0 : i32, i32
  }
  func.func @transform_2(%arg0: i32, %arg1: i32) -> (i32, i32) {
    %c0_i32 = arith.constant 0 : i32
    %c0_i32_0 = arith.constant 0 : i32
    %c0_i32_1 = arith.constant 0 : i32
    return %c0_i32, %c0_i32_0 : i32, i32
  }
  func.func @transform_3(%arg0: i32, %arg1: i32) -> (i32, i32, i32) {
    %c0_i32 = arith.constant 0 : i32
    %c0_i32_0 = arith.constant 0 : i32
    return %arg0, %c0_i32, %arg1 : i32, i32, i32
  }
}

</mosaic_0001>

<llo_original>
// kernel: tpu_custom_call.1
$region0: #{tpu_custom_call.1}
  #allocation0 [shape = 'u32[]', space=smem, size = 0x4, offset = 0x4, fixed_abs, tag = 'smem constant byte address 0x4 - core index']
  #allocation1 [shape = 'u32[144,128]{1,0:T(1,128)}', space=vmem, size = 0x12000, scoped, tag = 'internal scratch']
  %s0 = inlined_call_operand.hbm [shape: f32[2,48,128], index: 0, kind: input, shape index: {}]
  %s1 = inlined_call_operand.vmem [shape: f32[32,48], index: 1, kind: input, shape index: {}]
  %s2 = inlined_call_operand.vmem [shape: f32[32,1], index: 2, kind: input, shape index: {}]
  %s3 = inlined_call_operand.hbm [shape: f32[2,32,128], index: 3, kind: output, shape index: {}]
  %s4 = sld [smem:[#allocation0]]
  $region49: #{tpu_custom_call.1} parent=0
    _
  %s6 = ssub.s32 1, %s4
  %s7 = scalar_select 0, %s6, %s4
  $region1: #{tpu_custom_call.1} parent=0
    #allocation2 [shape = 'u8[49152]{0}', space=vmem, size = 0xc000, scoped, tag = 'input window, operand 0']
    #allocation3 [shape = 's32[2]{0}', space=sflag, size = 0x8, scoped, tag = 'scoped memory for tpu_custom_call.1']
    #allocation4 [shape = 's32[2]{0}', space=sflag, size = 0x8, scoped, tag = 'scoped memory for tpu_custom_call.1']
    #allocation5 [shape = 'u8[32768]{0}', space=vmem, size = 0x8000, scoped, tag = 'output window, operand 0']
    %8 = vsyncpa [#allocation3], 0
    %s9 = scalar_lea.sflag [#allocation3], 1
    %10 = vsyncpa %s9, 0
    %11 = vsyncpa [#allocation4], 0
    %s12 = scalar_lea.sflag [#allocation4], 1
    %13 = vsyncpa %s12, 0
    loop: start=0, step=1, limit=4
    $region2: #{tpu_custom_call.1} parent=1 // loop_pre_header
      _
    $region3: #{tpu_custom_call.1} parent=1 // loop_header
      %s15 = sphi 0, %s19
      %p16 = scmp.ge.s32.totalorder %s15, 4
      %s22 = sphi 0, %s34
      %s23 = sphi 0, %s30
      %s24 = sphi 0, %s22
      %s25 = sphi 0, %s23
      %s26 = sphi 0, %s24
      %s27 = sphi 0, %s25
      %s39 = sphi 0, %s41
      %s42 = sphi 0, %s39
      %s43 = sphi 0, %s42
      %s59 = sphi 0, %s43
      %s63 = sphi 0, %s63
      %s65 = sphi 0, %s63
      %s66 = sphi 0, %s65
      %s80 = sphi 0, %s66
      %s84 = sphi 0, %s84
      %s86 = sphi 0, %s84
      %s87 = sphi 0, %s86
      %s101 = sphi 0, %s87
      %s109 = sphi 0, %s111
      %s112 = sphi 0, %s109
      %s113 = sphi 0, %s112
      %s129 = sphi 0, %s113
    $region4: #{tpu_custom_call.1} parent=1 // loop_header_branch
      %18 = sbr.rel (%p16) target = $region8
    $region5: #{tpu_custom_call.1} parent=1 // loop_body
      %s20 = ssub.s32 %s15, 1
      %s21 = ssub.s32 %s15, 2
      %s28 = sadd.s32 1, %s23
      %p29 = scmp.ge.s32.totalorder %s28, 1
      %s30 = scalar_select %p29, 0, %s28
      %s31 = sadd.s32 1, %s22
      %s32 = scalar_select %p29, %s31, %s22
      %p33 = scmp.ge.s32.totalorder %s32, 2
      %s34 = scalar_select %p33, 0, %s32
      %s35 = ssub.s32 %s22, %s34
      %s36 = ssub.s32 %s23, %s30
      %s37 = sor.u32 %s35, %s36
      %p38 = scmp.eq.s32.totalorder %s37, 0
      %s40 = sadd.s32 %s39, 1
      %s41 = scalar_select %p38, %s39, %s40
      %p44 = pneg %p38
      %p45 = scmp.eq.s32.totalorder %s15, 1
      %p46 = por %p44, %p45
      %p47 = scmp.ne.s32.totalorder %s39, %s42
      %p48 = scmp.eq.s32.totalorder %s15, 0
      %p49 = por %p47, %p48
      %p50 = scmp.ne.s32.totalorder %s39, %s42
      %p51 = scmp.eq.s32.totalorder %s20, 1
      %p52 = por %p50, %p51
      %p53 = scmp.ne.s32.totalorder %s42, %s43
      %p54 = scmp.eq.s32.totalorder %s20, 0
      %p55 = por %p53, %p54
      %p56 = scmp.ne.s32.totalorder %s42, %s43
      %p57 = scmp.eq.s32.totalorder %s21, 1
      %p58 = por %p56, %p57
      %p60 = scmp.ne.s32.totalorder %s43, %s59
      %p61 = scmp.eq.s32.totalorder %s21, 0
      %p62 = por %p60, %p61
      %s64 = sadd.s32 %s63, 1
      %p67 = scmp.eq.s32.totalorder %s15, 1
      %p68 = scmp.ne.s32.totalorder %s63, %s65
      %p69 = scmp.eq.s32.totalorder %s15, 0
      %p70 = por %p68, %p69
      %p71 = scmp.ne.s32.totalorder %s63, %s65
      %p72 = scmp.eq.s32.totalorder %s20, 1
      %p73 = por %p71, %p72
      %p74 = scmp.ne.s32.totalorder %s65, %s66
      %p75 = scmp.eq.s32.totalorder %s20, 0
      %p76 = por %p74, %p75
      %p77 = scmp.ne.s32.totalorder %s65, %s66
      %p78 = scmp.eq.s32.totalorder %s21, 1
      %p79 = por %p77, %p78
      %p81 = scmp.ne.s32.totalorder %s66, %s80
      %p82 = scmp.eq.s32.totalorder %s21, 0
      %p83 = por %p81, %p82
      %s85 = sadd.s32 %s84, 1
      %p88 = scmp.eq.s32.totalorder %s15, 1
      %p89 = scmp.ne.s32.totalorder %s84, %s86
      %p90 = scmp.eq.s32.totalorder %s15, 0
      %p91 = por %p89, %p90
      %p92 = scmp.ne.s32.totalorder %s84, %s86
      %p93 = scmp.eq.s32.totalorder %s20, 1
      %p94 = por %p92, %p93
      %p95 = scmp.ne.s32.totalorder %s86, %s87
      %p96 = scmp.eq.s32.totalorder %s20, 0
      %p97 = por %p95, %p96
      %p98 = scmp.ne.s32.totalorder %s86, %s87
      %p99 = scmp.eq.s32.totalorder %s21, 1
      %p100 = por %p98, %p99
      %p102 = scmp.ne.s32.totalorder %s87, %s101
      %p103 = scmp.eq.s32.totalorder %s21, 0
      %p104 = por %p102, %p103
      %s105 = ssub.s32 %s22, %s34
      %s106 = ssub.s32 %s23, %s30
      %s107 = sor.u32 %s105, %s106
      %p108 = scmp.eq.s32.totalorder %s107, 0
      %s110 = sadd.s32 %s109, 1
      %s111 = scalar_select %p108, %s109, %s110
      %p114 = pneg %p108
      %p115 = scmp.eq.s32.totalorder %s15, 1
      %p116 = por %p114, %p115
      %p117 = scmp.ne.s32.totalorder %s109, %s112
      %p118 = scmp.eq.s32.totalorder %s15, 0
      %p119 = por %p117, %p118
      %p120 = scmp.ne.s32.totalorder %s109, %s112
      %p121 = scmp.eq.s32.totalorder %s20, 1
      %p122 = por %p120, %p121
      %p123 = scmp.ne.s32.totalorder %s112, %s113
      %p124 = scmp.eq.s32.totalorder %s20, 0
      %p125 = por %p123, %p124
      %p126 = scmp.ne.s32.totalorder %s112, %s113
      %p127 = scmp.eq.s32.totalorder %s21, 1
      %p128 = por %p126, %p127
      %p130 = scmp.ne.s32.totalorder %s113, %s129
      %p131 = scmp.eq.s32.totalorder %s21, 0
      %p132 = por %p130, %p131
      %p133 = scmp.le.s32.totalorder 1, %s15
      %p134 = scmp.lt.s32.totalorder %s15, 3
      %p135 = pnand %p133, %p134
      %p136 = pneg %p135
      // Predicated region
      $region9: #{tpu_custom_call.1} parent=5 // pred_check
        _
      $region10: #{tpu_custom_call.1} parent=5 // pred_check_branch
        %138 = sbr.rel (%p135) target = $region12
      $region11: #{tpu_custom_call.1} parent=5 // pred_region
        %s139 = ssub.s32 %s15, 1
        // Predicated region
        $region13: #{tpu_custom_call.1} parent=11 // pred_check
          %p140 = pneg %p76
        $region14: #{tpu_custom_call.1} parent=11 // pred_check_branch
          %142 = sbr.rel (%p140) target = $region16
        $region15: #{tpu_custom_call.1} parent=11 // pred_region
          _
        $region16: #{tpu_custom_call.1} parent=11 // pred_fallthru
          _
        // Predicated region
        $region17: #{tpu_custom_call.1} parent=11 // pred_check
          %p143 = pneg %p97
        $region18: #{tpu_custom_call.1} parent=11 // pred_check_branch
          %145 = sbr.rel (%p143) target = $region20
        $region19: #{tpu_custom_call.1} parent=11 // pred_region
          _
        $region20: #{tpu_custom_call.1} parent=11 // pred_fallthru
          _
      $region12: #{tpu_custom_call.1} parent=5 // pred_fallthru
        _
      %p146 = scmp.lt.s32.totalorder %s15, 2
      // Predicated region
      $region21: #{tpu_custom_call.1} parent=5 // pred_check
        %p147 = pneg %p146
      $region22: #{tpu_custom_call.1} parent=5 // pred_check_branch
        %149 = sbr.rel (%p147) target = $region24
      $region23: #{tpu_custom_call.1} parent=5 // pred_region
        // Predicated region
        $region25: #{tpu_custom_call.1} parent=23 // pred_check
          %p150 = pneg %p49
        $region26: #{tpu_custom_call.1} parent=23 // pred_check_branch
          %152 = sbr.rel (%p150) target = $region28
        $region27: #{tpu_custom_call.1} parent=23 // pred_region
          %s153 = sand.u32 %s39, 1
          %s154 = scalar_lea.sflag [#allocation3], %s153
          %s155 = sand.u32 %s39, 1
          %s156 = smul.addr %s155, 48
          %s157 = scalar_lea.vmem [#allocation2], %s156
          %s159 = ssub.s32 768, 768
          %160 = vsyncadd %s154, %s159
          %s161 = smul.addr %s22, 6
          %s162 = sadd.s32 %s23, %s161
          %s163 = smul.addr %s162, 128
          %s164 = scalar_lea.hbm %s0, %s163
          %s165 = sshll.u32 %s157, 4
          %s166 = int_to_ptr.vmem [resolvable:$true] %s165
          %171 = dma.hbm_to_vmem [thread:$0]  %s164, 768, %s166, %s154, 128, 128, 8
        $region28: #{tpu_custom_call.1} parent=23 // pred_fallthru
          _
      $region24: #{tpu_custom_call.1} parent=5 // pred_fallthru
        _
      %p172 = scmp.le.s32.totalorder 1, %s15
      %p173 = scmp.lt.s32.totalorder %s15, 3
      %p174 = pnand %p172, %p173
      %p175 = pneg %p174
      // Predicated region
      $region29: #{tpu_custom_call.1} parent=5 // pred_check
        _
      $region30: #{tpu_custom_call.1} parent=5 // pred_check_branch
        %177 = sbr.rel (%p174) target = $region32
      $region31: #{tpu_custom_call.1} parent=5 // pred_region
        %s178 = ssub.s32 %s15, 1
        %s179 = sand.u32 %s42, 1
        %s180 = scalar_lea.sflag [#allocation3], %s179
        %s181 = sand.u32 %s42, 1
        %s182 = smul.addr %s181, 48
        %s183 = scalar_lea.vmem [#allocation2], %s182
        // Predicated region
        $region33: #{tpu_custom_call.1} parent=31 // pred_check
          %p184 = pneg %p55
        $region34: #{tpu_custom_call.1} parent=31 // pred_check_branch
          %186 = sbr.rel (%p184) target = $region36
        $region35: #{tpu_custom_call.1} parent=31 // pred_region
          %187 = dma.done %s180, 768
        $region36: #{tpu_custom_call.1} parent=31 // pred_fallthru
          _
        %s188 = sand.u32 %s42, 1
        %s189 = scalar_lea.sflag [#allocation3], %s188
        %s190 = sand.u32 %s42, 1
        %s191 = smul.addr %s190, 48
        %s192 = scalar_lea.vmem [#allocation2], %s191
        %p193 = pneg %p55
        %p194 = pneg %p52
        %p195 = pneg %p76
        %p196 = pneg %p73
        %p197 = pneg %p97
        %p198 = pneg %p94
        %p199 = pneg %p125
        %p200 = pneg %p122
        %s201 = sand.u32 %s112, 1
        %s202 = scalar_lea.sflag [#allocation4], %s201
        %s203 = sand.u32 %s112, 1
        %s204 = smul.addr %s203, 32
        %s205 = scalar_lea.vmem [#allocation5], %s204
        %v206 = vld [vmem:[%s1] sm:$0xff]
        %v207 = vld [vmem:[%s1 + $0x8] sm:$0xff]
        %v208 = vld [vmem:[%s1 + $0x10] sm:$0xff]
        %v209 = vld [vmem:[%s1 + $0x18] sm:$0xff]
        %v210 = vld [vmem:[%s183] sm:$0xff]
        %v211 = vld [vmem:[%s183 + $0x8] sm:$0xff]
        %v212 = vld [vmem:[%s183 + $0x10] sm:$0xff]
        %v213 = vld [vmem:[%s183 + $0x18] sm:$0xff]
        %v214 = vld [vmem:[%s183 + $0x20] sm:$0xff]
        %v215 = vld [vmem:[%s183 + $0x28] sm:$0xff]
        %v216 = vld [vmem:[%s2] sm:$0xff]
        %v217 = vld [vmem:[%s2 + $0x8] sm:$0xff]
        %v218 = vld [vmem:[%s2 + $0x10] sm:$0xff]
        %v219 = vld [vmem:[%s2 + $0x18] sm:$0xff]
        %221 = vset.pattern.permute.xlu0 0
        %222 = vperm.xlu0 %221, %v216
        %v223 = vpop.permute.xlu0 %222
        %226 = vset.pattern.permute.xlu0 0
        %227 = vperm.xlu0 %226, %v217
        %v228 = vpop.permute.xlu0 %227
        %231 = vset.pattern.permute.xlu0 0
        %232 = vperm.xlu0 %231, %v218
        %v233 = vpop.permute.xlu0 %232
        %236 = vset.pattern.permute.xlu0 0
        %237 = vperm.xlu0 %236, %v219
        %v238 = vpop.permute.xlu0 %237
        %vm240 = vcmask 392192
        %v242 = vsel %vm240, %v206, 0
        %v245 = vsel %vm240, %v207, 0
        %v248 = vsel %vm240, %v208, 0
        %v251 = vsel %vm240, %v209, 0
        %253 = vmatprep.subr.mxu0 0.0
        %254 = vmatpush1.msra.mxu0 0.0
        %255 = vmatprep.subr.mxu0 0.0
        %256 = vmatpush1.msra.mxu0 0.0
        %257 = vmatprep.subr.mxu0 0.0
        %258 = vmatpush1.msra.mxu0 0.0
        %259 = vmatprep.subr.mxu0 0.0
        %260 = vmatpush1.msra.mxu0 0.0
        %261 = vmatprep.subr.mxu0 0.0
        %262 = vmatpush1.msra.mxu0 0.0
        %263 = vmatprep.subr.mxu0 0.0
        %264 = vmatpush1.msra.mxu0 0.0
        %265 = vmatprep.subr.mxu0 0.0
        %266 = vmatpush1.msra.mxu0 0.0
        %267 = vmatprep.subr.mxu0 0.0
        %268 = vmatpush1.msra.mxu0 0.0
        %269 = vmatprep.subr.mxu0 0.0
        %270 = vmatpush1.msra.mxu0 0.0
        %271 = vmatprep.subr.mxu0 0.0
        %272 = vmatpush1.msra.mxu0 0.0
        %273 = vmatprep.subr.mxu0 0.0
        %274 = vmatpush1.msra.mxu0 %v215
        %275 = vmatprep.subr.mxu0 0.0
        %276 = vmatpush1.msra.mxu0 %v214
        %277 = vmatprep.subr.mxu0 0.0
        %278 = vmatpush1.msra.mxu0 %v213
        %279 = vmatprep.subr.mxu0 0.0
        %280 = vmatpush1.msra.mxu0 %v212
        %281 = vmatprep.subr.mxu0 0.0
        %282 = vmatpush1.msra.mxu0 %v211
        %283 = vmatprep.subr.mxu0 0.0
        %284 = vmatpush1.msra.mxu0 %v210
        %285 = vmatprep.subr.mxu0 0.0
        %286 = vmatpush2.msra.mxu0 0.0
        %287 = vmatprep.subr.mxu0 0.0
        %288 = vmatpush2.msra.mxu0 0.0
        %289 = vmatprep.subr.mxu0 0.0
        %290 = vmatpush2.msra.mxu0 0.0
        %291 = vmatprep.subr.mxu0 0.0
        %292 = vmatpush2.msra.mxu0 0.0
        %293 = vmatprep.subr.mxu0 0.0
        %294 = vmatpush2.msra.mxu0 0.0
        %295 = vmatprep.subr.mxu0 0.0
        %296 = vmatpush2.msra.mxu0 0.0
        %297 = vmatprep.subr.mxu0 0.0
        %298 = vmatpush2.msra.mxu0 0.0
        %299 = vmatprep.subr.mxu0 0.0
        %300 = vmatpush2.msra.mxu0 0.0
        %301 = vmatprep.subr.mxu0 0.0
        %302 = vmatpush2.msra.mxu0 0.0
        %303 = vmatprep.subr.mxu0 0.0
        %304 = vmatpush2.msra.mxu0 0.0
        %305 = vmatprep.subr.mxu0 0.0
        %306 = vmatpush2.msra.mxu0 0.0
        %307 = vmatprep.subr.mxu0 0.0
        %308 = vmatpush2.msra.mxu0 0.0
        %309 = vmatprep.subr.mxu0 0.0
        %310 = vmatpush2.msra.mxu0 0.0
        %311 = vmatprep.subr.mxu0 0.0
        %312 = vmatpush2.msra.mxu0 0.0
        %313 = vmatprep.subr.mxu0 0.0
        %314 = vmatpush2.msra.mxu0 0.0
        %315 = vmatprep.subr.mxu0 0.0
        %316 = vmatpush2.msra.mxu0 0.0
        %317 = vmatprep.mubr.f32.mxu0 0.0
        %318 = vmatmul.mubr.f32.gmra.mxu0 %v242
        %v319 = vpop.f32.mrf.mxu0
        %v320 = vadd.f32 %v223, %v319
        %v321 = vpop.f32.mrf.mxu0
        %322 = vmatprep.mubr.f32.mxu0 0.0
        %323 = vmatmul.mubr.f32.gmra.mxu0 %v245
        %v324 = vpop.f32.mrf.mxu0
        %v325 = vadd.f32 %v228, %v324
        %v326 = vpop.f32.mrf.mxu0
        %327 = vmatprep.mubr.f32.mxu0 0.0
        %328 = vmatmul.mubr.f32.gmra.mxu0 %v248
        %v329 = vpop.f32.mrf.mxu0
        %v330 = vadd.f32 %v233, %v329
        %v331 = vpop.f32.mrf.mxu0
        %332 = vmatprep.mubr.f32.mxu0 0.0
        %333 = vmatmul.mubr.f32.gmra.mxu0 %v251
        %v334 = vpop.f32.mrf.mxu0
        %v335 = vadd.f32 %v238, %v334
        %v336 = vpop.f32.mrf.mxu0
        %337 = vdwg.mxu0
        %v338 = vmax.f32 %v320, 0.0
        %v339 = vmax.f32 %v325, 0.0
        %v340 = vmax.f32 %v330, 0.0
        %v341 = vmax.f32 %v335, 0.0
        %342 = vst [vmem:[%s205] sm:$0xff] %v338
        %343 = vst [vmem:[%s205 + $0x8] sm:$0xff] %v339
        %344 = vst [vmem:[%s205 + $0x10] sm:$0xff] %v340
        %345 = vst [vmem:[%s205 + $0x18] sm:$0xff] %v341
        %s346 = sand.u32 %s112, 1
        %s347 = scalar_lea.sflag [#allocation4], %s346
        %s348 = sand.u32 %s112, 1
        %s349 = smul.addr %s348, 32
        %s350 = scalar_lea.vmem [#allocation5], %s349
        // Predicated region
        $region37: #{tpu_custom_call.1} parent=31 // pred_check
          %p351 = pneg %p122
        $region38: #{tpu_custom_call.1} parent=31 // pred_check_branch
          %353 = sbr.rel (%p351) target = $region40
        $region39: #{tpu_custom_call.1} parent=31 // pred_region
          %s355 = ssub.s32 512, 512
          %356 = vsyncadd %s347, %s355
          %s357 = smul.addr %s24, 4
          %s358 = sadd.s32 %s25, %s357
          %s359 = smul.addr %s358, 128
          %s360 = scalar_lea.hbm %s3, %s359
          %s361 = sshll.u32 %s350, 4
          %s362 = int_to_ptr.vmem [resolvable:$true] %s361
          %367 = dma.vmem_to_hbm [thread:$0]  %s362, 512, %s360, %s347, 128, 128, 8
        $region40: #{tpu_custom_call.1} parent=31 // pred_fallthru
          _
      $region32: #{tpu_custom_call.1} parent=5 // pred_fallthru
        _
      %p368 = scmp.le.s32.totalorder 2, %s15
      // Predicated region
      $region41: #{tpu_custom_call.1} parent=5 // pred_check
        %p369 = pneg %p368
      $region42: #{tpu_custom_call.1} parent=5 // pred_check_branch
        %371 = sbr.rel (%p369) target = $region44
      $region43: #{tpu_custom_call.1} parent=5 // pred_region
        %s372 = ssub.s32 %s15, 2
        // Predicated region
        $region45: #{tpu_custom_call.1} parent=43 // pred_check
          %p373 = pneg %p128
        $region46: #{tpu_custom_call.1} parent=43 // pred_check_branch
          %375 = sbr.rel (%p373) target = $region48
        $region47: #{tpu_custom_call.1} parent=43 // pred_region
          %s376 = sand.u32 %s113, 1
          %s377 = scalar_lea.sflag [#allocation4], %s376
          %s378 = sand.u32 %s113, 1
          %s379 = smul.addr %s378, 32
          %s380 = scalar_lea.vmem [#allocation5], %s379
          %381 = dma.done %s377, 512
        $region48: #{tpu_custom_call.1} parent=43 // pred_fallthru
          _
      $region44: #{tpu_custom_call.1} parent=5 // pred_fallthru
        _
    $region6: #{tpu_custom_call.1} parent=1 // loop_footer
      %s19 = sadd.s32 1, %s15
    $region7: #{tpu_custom_call.1} parent=1 // loop_footer_branch
      %14 = sbr.rel target = $region3
    $region8: #{tpu_custom_call.1} parent=1 // loop_exit
      _
    %382 = vsyncpa [#allocation3], 1
    %s383 = scalar_lea.sflag [#allocation3], 1
    %384 = vsyncpa %s383, 1
    %385 = vsyncpa [#allocation4], 1
    %s386 = scalar_lea.sflag [#allocation4], 1
    %387 = vsyncpa %s386, 1

</llo_original>
